<compile_context>
chip_gen: v7x
topology: tpu7x:2x2x1
jax: 0.10.0
libtpu: 0.0.40
codegen_flags: <defaults>
</compile_context>

<pallas_src>
import jax
import jax.numpy as jnp
from jax.experimental import pallas as pl
from jax.experimental.pallas import tpu as pltpu

IGNORE_INDEX = 255
THRESH = 0.7


def _ce_kernel(logits_ref, labels_ref, loss_ref):
    # logits_ref: (1, C, L) source dtype, labels_ref: (1, 1, L) i32,
    # loss_ref:   (1, 1, L) f32.  Pixels are on the lane axis (L), classes on
    # the sublane axis (C) -> all class reductions are axis=1 (XLU).
    x = logits_ref[...].astype(jnp.float32)           # upcast in-register
    lbl = labels_ref[...]                              # (1, 1, L)

    # numerically-stable log-sum-exp over the class (sublane) axis
    m = jnp.max(x, axis=1, keepdims=True)              # (1, 1, L)
    lse = jnp.log(jnp.sum(jnp.exp(x - m), axis=1, keepdims=True)) + m

    # gather the logit at the label index via one-hot select (no dynamic gather)
    cls = jax.lax.broadcasted_iota(jnp.int32, x.shape, 1)   # class id per sublane
    picked = jnp.sum(jnp.where(cls == lbl, x, 0.0), axis=1, keepdims=True)

    valid = lbl != IGNORE_INDEX
    # CrossEntropyLoss(reduction='none', ignore_index): 0 at ignored positions
    loss_ref[...] = jnp.where(valid, lse - picked, 0.0)


def per_pixel_ce(logits_nchw, labels_nhw, block_lanes=8192):
    """Per-pixel cross entropy (reduction='none'), flattened to (N*H*W,)."""
    n, c, h, w = logits_nchw.shape
    hw = h * w

    # free reshapes; keep logits in their source dtype (bf16 stays bf16 in HBM)
    x = logits_nchw.reshape(n, c, hw)
    lbl = labels_nhw.reshape(n, 1, hw).astype(jnp.int32)

    # lane-block: big (>=2048 preferred) but no larger than needed; multiple of 128
    lanes = min(block_lanes, pl.cdiv(hw, 128) * 128)
    nb = pl.cdiv(hw, lanes)   # tail block handled by Pallas masking (no jnp.pad)

    loss = pl.pallas_call(
        _ce_kernel,
        out_shape=jax.ShapeDtypeStruct((n, 1, hw), jnp.float32),
        grid_spec=pltpu.PrefetchScalarGridSpec(
            num_scalar_prefetch=0,
            grid=(n, nb),
            in_specs=[
                pl.BlockSpec((1, c, lanes), lambda i, j: (i, 0, j)),
                pl.BlockSpec((1, 1, lanes), lambda i, j: (i, 0, j)),
            ],
            out_specs=pl.BlockSpec((1, 1, lanes), lambda i, j: (i, 0, j)),
        ),
        compiler_params=pltpu.CompilerParams(
            # both axes independent -> shards across v7x's two TensorCores
            dimension_semantics=("parallel", "parallel")),
    )(x, lbl)
    return loss.reshape(-1)


def ohem_ce_loss(logits, labels, thresh=THRESH, ignore_index=IGNORE_INDEX):
    """Matches OHEM_CELoss.forward semantics."""
    loss = per_pixel_ce(logits, labels)                 # (N*H*W,) f32
    lbl_flat = labels.reshape(-1)

    n_min = jnp.sum(lbl_flat != ignore_index) // 16
    t = -jnp.log(jnp.float32(thresh))

    # threshold stats: cheap O(P) pass over the small f32 loss array
    above = loss > t
    count_above = jnp.sum(above)
    sum_above = jnp.sum(jnp.where(above, loss, 0.0))

    def _mean_above(_):
        # max(.,1) guards the 0/0 case (all-ignore label map) and the
        # where-NaN-grad trap; value is unchanged whenever count_above > 0.
        return sum_above / jnp.maximum(count_above, 1).astype(jnp.float32)

    def _topk_fallback(_):
        # only executed when count_above < n_min (lax.cond), so the
        # O(P log P) sort does not run on the common path.
        sorted_desc = jnp.sort(loss)[::-1]
        csum = jnp.cumsum(sorted_desc)
        idx = jnp.maximum(n_min - 1, 0)
        return csum[idx] / jnp.maximum(n_min, 1).astype(jnp.float32)

    return jax.lax.cond(count_above < n_min, _topk_fallback, _mean_above, None)


if __name__ == "__main__":
    key = jax.random.PRNGKey(0)
    k1, k2, k3 = jax.random.split(key, 3)

    N, C, H, W = 2, 4, 16, 16
    logits = jax.random.normal(k1, (N, C, H, W), dtype=jnp.float32)
    labels = jax.random.randint(k2, (N, H, W), 0, C, dtype=jnp.int32)
    # sprinkle some ignore_index pixels
    ignore_mask = jax.random.uniform(k3, (N, H, W)) < 0.1
    labels = jnp.where(ignore_mask, IGNORE_INDEX, labels)

    out = ohem_ce_loss(logits, labels)
    jax.block_until_ready(out)
    print("KERNEL_OK")
</pallas_src>

<mosaic_0001>
module attributes {stable_mosaic.version = 11 : i64} {
  func.func @_ce_kernel(%arg0: i32, %arg1: i32, %arg2: memref<1x4x256xf32, #tpu.memory_space<vmem>>, %arg3: memref<1x1x256xi32, #tpu.memory_space<vmem>>, %arg4: memref<1x1x256xf32, #tpu.memory_space<vmem>>) attributes {dimension_semantics = [#tpu.dimension_semantics<parallel>, #tpu.dimension_semantics<parallel>], iteration_bounds = array<i64: 2, 1>, scalar_prefetch = 0 : i64, scratch_operands = 0 : i64, tpu.core_type = #tpu.core_type<tc>, window_params = [{transform_indices = @transform_0, window_bounds = array<i64: 1, 4, 256>}, {transform_indices = @transform_1, window_bounds = array<i64: 1, 1, 256>}, {transform_indices = @transform_2, window_bounds = array<i64: 1, 1, 256>}]} {
    %c0 = arith.constant 0 : index
    %c0_0 = arith.constant 0 : index
    %c0_1 = arith.constant 0 : index
    %0 = vector.load %arg2[%c0, %c0_0, %c0_1] : memref<1x4x256xf32, #tpu.memory_space<vmem>>, vector<1x4x256xf32>
    %c0_2 = arith.constant 0 : index
    %c0_3 = arith.constant 0 : index
    %c0_4 = arith.constant 0 : index
    %1 = vector.load %arg3[%c0_2, %c0_3, %c0_4] : memref<1x1x256xi32, #tpu.memory_space<vmem>>, vector<1x1x256xi32>
    %cst = arith.constant dense<0xFF800000> : vector<1x256xf32>
    %2 = vector.multi_reduction <maximumf>, %0, %cst [1] : vector<1x4x256xf32> to vector<1x256xf32>
    %3 = vector.shape_cast %2 : vector<1x256xf32> to vector<1x1x256xf32>
    %4 = vector.broadcast %3 : vector<1x1x256xf32> to vector<1x4x256xf32>
    %5 = arith.subf %0, %4 : vector<1x4x256xf32>
    %6 = math.exp %5 : vector<1x4x256xf32>
    %cst_5 = arith.constant dense<0.000000e+00> : vector<1x256xf32>
    %7 = vector.multi_reduction <add>, %6, %cst_5 [1] : vector<1x4x256xf32> to vector<1x256xf32>
    %8 = vector.shape_cast %7 : vector<1x256xf32> to vector<1x1x256xf32>
    %9 = math.log %8 : vector<1x1x256xf32>
    %10 = arith.addf %9, %3 : vector<1x1x256xf32>
    %11 = tpu.iota {dimensions = array<i32: 1>} : vector<1x4x256xi32>
    %12 = vector.broadcast %1 : vector<1x1x256xi32> to vector<1x4x256xi32>
    %13 = arith.cmpi eq, %11, %12 : vector<1x4x256xi32>
    %cst_6 = arith.constant 0.000000e+00 : f32
    %14 = vector.broadcast %cst_6 : f32 to vector<1x4x256xf32>
    %15 = arith.select %13, %0, %14 : vector<1x4x256xi1>, vector<1x4x256xf32>
    %cst_7 = arith.constant dense<0.000000e+00> : vector<1x256xf32>
    %16 = vector.multi_reduction <add>, %15, %cst_7 [1] : vector<1x4x256xf32> to vector<1x256xf32>
    %17 = vector.shape_cast %16 : vector<1x256xf32> to vector<1x1x256xf32>
    %c255_i32 = arith.constant 255 : i32
    %18 = vector.broadcast %c255_i32 : i32 to vector<1x1x256xi32>
    %19 = arith.cmpi ne, %1, %18 : vector<1x1x256xi32>
    %20 = arith.subf %10, %17 : vector<1x1x256xf32>
    %cst_8 = arith.constant 0.000000e+00 : f32
    %21 = vector.broadcast %cst_8 : f32 to vector<1x1x256xf32>
    %22 = arith.select %19, %20, %21 : vector<1x1x256xi1>, vector<1x1x256xf32>
    %c0_9 = arith.constant 0 : index
    %c0_10 = arith.constant 0 : index
    %c0_11 = arith.constant 0 : index
    %23 = vector.load %arg4[%c0_9, %c0_10, %c0_11] : memref<1x1x256xf32, #tpu.memory_space<vmem>>, vector<1x1x256xf32>
    tpu.vector_store %arg4[%c0_9, %c0_10, %c0_11], %22 {strides = array<i32>} : memref<1x1x256xf32, #tpu.memory_space<vmem>>, vector<1x1x256xf32>,
    return
  }
  func.func @transform_0(%arg0: i32, %arg1: i32) -> (i32, i32, i32) {
    %c0_i32 = arith.constant 0 : i32
    %c0_i32_0 = arith.constant 0 : i32
    return %arg0, %c0_i32, %arg1 : i32, i32, i32
  }
  func.func @transform_1(%arg0: i32, %arg1: i32) -> (i32, i32, i32) {
    %c0_i32 = arith.constant 0 : i32
    %c0_i32_0 = arith.constant 0 : i32
    return %arg0, %c0_i32, %arg1 : i32, i32, i32
  }
  func.func @transform_2(%arg0: i32, %arg1: i32) -> (i32, i32, i32) {
    %c0_i32 = arith.constant 0 : i32
    %c0_i32_0 = arith.constant 0 : i32
    return %arg0, %c0_i32, %arg1 : i32, i32, i32
  }
}

</mosaic_0001>

<llo_original>
// kernel: tpu_custom_call.1
$region0: #{tpu_custom_call.1}
  #allocation0 [shape = 'u32[]', space=smem, size = 0x4, offset = 0x4, fixed_abs, tag = 'smem constant byte address 0x4 - core index']
  #allocation1 [shape = 'u32[144,128]{1,0:T(1,128)}', space=vmem, size = 0x12000, scoped, tag = 'internal scratch']
  %s0 = inlined_call_operand.hbm [shape: f32[2,4,256], index: 0, kind: input, shape index: {}]
  %s1 = inlined_call_operand.hbm [shape: s32[2,1,256], index: 1, kind: input, shape index: {}]
  %s2 = inlined_call_operand.hbm [shape: f32[2,1,256], index: 2, kind: output, shape index: {}]
  %s3 = sld [smem:[#allocation0]]
  $region49: #{tpu_custom_call.1} parent=0
    _
  %s5 = ssub.s32 1, %s3
  %s6 = scalar_select 0, %s5, %s3
  $region1: #{tpu_custom_call.1} parent=0
    #allocation2 [shape = 'u8[8192]{0}', space=vmem, size = 0x2000, scoped, tag = 'input window, operand 0']
    #allocation3 [shape = 's32[2]{0}', space=sflag, size = 0x8, scoped, tag = 'scoped memory for tpu_custom_call.1']
    #allocation4 [shape = 's32[2]{0}', space=sflag, size = 0x8, scoped, tag = 'scoped memory for tpu_custom_call.1']
    #allocation5 [shape = 'u8[2048]{0}', space=vmem, size = 0x800, scoped, tag = 'input window, operand 1']
    #allocation6 [shape = 's32[2]{0}', space=sflag, size = 0x8, scoped, tag = 'scoped memory for tpu_custom_call.1']
    #allocation7 [shape = 'u8[2048]{0}', space=vmem, size = 0x800, scoped, tag = 'output window, operand 0']
    %7 = vsyncpa [#allocation3], 0
    %s8 = scalar_lea.sflag [#allocation3], 1
    %9 = vsyncpa %s8, 0
    %10 = vsyncpa [#allocation6], 0
    %s11 = scalar_lea.sflag [#allocation6], 1
    %12 = vsyncpa %s11, 0
    %13 = vsyncpa [#allocation4], 0
    %s14 = scalar_lea.sflag [#allocation4], 1
    %15 = vsyncpa %s14, 0
    loop: start=0, step=1, limit=4
    $region2: #{tpu_custom_call.1} parent=1 // loop_pre_header
      _
    $region3: #{tpu_custom_call.1} parent=1 // loop_header
      %s17 = sphi 0, %s21
      %p18 = scmp.ge.s32.totalorder %s17, 4
      %s24 = sphi 0, %s36
      %s25 = sphi 0, %s32
      %s26 = sphi 0, %s24
      %s27 = sphi 0, %s25
      %s28 = sphi 0, %s26
      %s29 = sphi 0, %s27
      %s41 = sphi 0, %s43
      %s44 = sphi 0, %s41
      %s45 = sphi 0, %s44
      %s61 = sphi 0, %s45
      %s69 = sphi 0, %s71
      %s72 = sphi 0, %s69
      %s73 = sphi 0, %s72
      %s89 = sphi 0, %s73
      %s97 = sphi 0, %s99
      %s100 = sphi 0, %s97
      %s101 = sphi 0, %s100
      %s117 = sphi 0, %s101
    $region4: #{tpu_custom_call.1} parent=1 // loop_header_branch
      %20 = sbr.rel (%p18) target = $region8
    $region5: #{tpu_custom_call.1} parent=1 // loop_body
      %s22 = ssub.s32 %s17, 1
      %s23 = ssub.s32 %s17, 2
      %s30 = sadd.s32 1, %s25
      %p31 = scmp.ge.s32.totalorder %s30, 1
      %s32 = scalar_select %p31, 0, %s30
      %s33 = sadd.s32 1, %s24
      %s34 = scalar_select %p31, %s33, %s24
      %p35 = scmp.ge.s32.totalorder %s34, 2
      %s36 = scalar_select %p35, 0, %s34
      %s37 = ssub.s32 %s24, %s36
      %s38 = ssub.s32 %s25, %s32
      %s39 = sor.u32 %s37, %s38
      %p40 = scmp.eq.s32.totalorder %s39, 0
      %s42 = sadd.s32 %s41, 1
      %s43 = scalar_select %p40, %s41, %s42
      %p46 = pneg %p40
      %p47 = scmp.eq.s32.totalorder %s17, 1
      %p48 = por %p46, %p47
      %p49 = scmp.ne.s32.totalorder %s41, %s44
      %p50 = scmp.eq.s32.totalorder %s17, 0
      %p51 = por %p49, %p50
      %p52 = scmp.ne.s32.totalorder %s41, %s44
      %p53 = scmp.eq.s32.totalorder %s22, 1
      %p54 = por %p52, %p53
      %p55 = scmp.ne.s32.totalorder %s44, %s45
      %p56 = scmp.eq.s32.totalorder %s22, 0
      %p57 = por %p55, %p56
      %p58 = scmp.ne.s32.totalorder %s44, %s45
      %p59 = scmp.eq.s32.totalorder %s23, 1
      %p60 = por %p58, %p59
      %p62 = scmp.ne.s32.totalorder %s45, %s61
      %p63 = scmp.eq.s32.totalorder %s23, 0
      %p64 = por %p62, %p63
      %s65 = ssub.s32 %s24, %s36
      %s66 = ssub.s32 %s25, %s32
      %s67 = sor.u32 %s65, %s66
      %p68 = scmp.eq.s32.totalorder %s67, 0
      %s70 = sadd.s32 %s69, 1
      %s71 = scalar_select %p68, %s69, %s70
      %p74 = pneg %p68
      %p75 = scmp.eq.s32.totalorder %s17, 1
      %p76 = por %p74, %p75
      %p77 = scmp.ne.s32.totalorder %s69, %s72
      %p78 = scmp.eq.s32.totalorder %s17, 0
      %p79 = por %p77, %p78
      %p80 = scmp.ne.s32.totalorder %s69, %s72
      %p81 = scmp.eq.s32.totalorder %s22, 1
      %p82 = por %p80, %p81
      %p83 = scmp.ne.s32.totalorder %s72, %s73
      %p84 = scmp.eq.s32.totalorder %s22, 0
      %p85 = por %p83, %p84
      %p86 = scmp.ne.s32.totalorder %s72, %s73
      %p87 = scmp.eq.s32.totalorder %s23, 1
      %p88 = por %p86, %p87
      %p90 = scmp.ne.s32.totalorder %s73, %s89
      %p91 = scmp.eq.s32.totalorder %s23, 0
      %p92 = por %p90, %p91
      %s93 = ssub.s32 %s24, %s36
      %s94 = ssub.s32 %s25, %s32
      %s95 = sor.u32 %s93, %s94
      %p96 = scmp.eq.s32.totalorder %s95, 0
      %s98 = sadd.s32 %s97, 1
      %s99 = scalar_select %p96, %s97, %s98
      %p102 = pneg %p96
      %p103 = scmp.eq.s32.totalorder %s17, 1
      %p104 = por %p102, %p103
      %p105 = scmp.ne.s32.totalorder %s97, %s100
      %p106 = scmp.eq.s32.totalorder %s17, 0
      %p107 = por %p105, %p106
      %p108 = scmp.ne.s32.totalorder %s97, %s100
      %p109 = scmp.eq.s32.totalorder %s22, 1
      %p110 = por %p108, %p109
      %p111 = scmp.ne.s32.totalorder %s100, %s101
      %p112 = scmp.eq.s32.totalorder %s22, 0
      %p113 = por %p111, %p112
      %p114 = scmp.ne.s32.totalorder %s100, %s101
      %p115 = scmp.eq.s32.totalorder %s23, 1
      %p116 = por %p114, %p115
      %p118 = scmp.ne.s32.totalorder %s101, %s117
      %p119 = scmp.eq.s32.totalorder %s23, 0
      %p120 = por %p118, %p119
      %p121 = scmp.le.s32.totalorder 1, %s17
      %p122 = scmp.lt.s32.totalorder %s17, 3
      %p123 = pnand %p121, %p122
      %p124 = pneg %p123
      // Predicated region
      $region9: #{tpu_custom_call.1} parent=5 // pred_check
        _
      $region10: #{tpu_custom_call.1} parent=5 // pred_check_branch
        %126 = sbr.rel (%p123) target = $region12
      $region11: #{tpu_custom_call.1} parent=5 // pred_region
        %s127 = ssub.s32 %s17, 1
      $region12: #{tpu_custom_call.1} parent=5 // pred_fallthru
        _
      %p128 = scmp.lt.s32.totalorder %s17, 2
      // Predicated region
      $region13: #{tpu_custom_call.1} parent=5 // pred_check
        %p129 = pneg %p128
      $region14: #{tpu_custom_call.1} parent=5 // pred_check_branch
        %131 = sbr.rel (%p129) target = $region16
      $region15: #{tpu_custom_call.1} parent=5 // pred_region
        // Predicated region
        $region17: #{tpu_custom_call.1} parent=15 // pred_check
          %p132 = pneg %p51
        $region18: #{tpu_custom_call.1} parent=15 // pred_check_branch
          %134 = sbr.rel (%p132) target = $region20
        $region19: #{tpu_custom_call.1} parent=15 // pred_region
          %s135 = sand.u32 %s41, 1
          %s136 = scalar_lea.sflag [#allocation3], %s135
          %s137 = sand.u32 %s41, 1
          %s138 = smul.addr %s137, 8
          %s139 = scalar_lea.vmem [#allocation2], %s138
          %s140 = smul.u32 2, %s25
          %s142 = ssub.s32 128, 128
          %143 = vsyncadd %s136, %s142
          %s144 = smul.addr %s24, 2
          %s145 = sadd.s32 %s140, %s144
          %s146 = smul.addr %s145, 64
          %s147 = scalar_lea.hbm %s0, %s146
          %s149 = sshll.u32 %s139, 4
          %s150 = int_to_ptr.vmem [resolvable:$true] %s149
          %152 = dma.hbm_to_vmem [thread:$0]  %s147, 128, %s150, %s136
        $region20: #{tpu_custom_call.1} parent=15 // pred_fallthru
          _
        // Predicated region
        $region21: #{tpu_custom_call.1} parent=15 // pred_check
          %p153 = pneg %p79
        $region22: #{tpu_custom_call.1} parent=15 // pred_check_branch
          %155 = sbr.rel (%p153) target = $region24
        $region23: #{tpu_custom_call.1} parent=15 // pred_region
          %s156 = sand.u32 %s69, 1
          %s157 = scalar_lea.sflag [#allocation6], %s156
          %s158 = sand.u32 %s69, 1
          %s159 = smul.addr %s158, 2
          %s160 = scalar_lea.vmem [#allocation5], %s159
          %s161 = smul.u32 2, %s25
          %s163 = ssub.s32 32, 32
          %164 = vsyncadd %s157, %s163
          %s165 = smul.addr %s24, 2
          %s166 = sadd.s32 %s161, %s165
          %s167 = smul.addr %s166, 16
          %s168 = scalar_lea.hbm %s1, %s167
          %s170 = sshll.u32 %s160, 4
          %s171 = int_to_ptr.vmem [resolvable:$true] %s170
          %173 = dma.hbm_to_vmem [thread:$0]  %s168, 32, %s171, %s157
        $region24: #{tpu_custom_call.1} parent=15 // pred_fallthru
          _
      $region16: #{tpu_custom_call.1} parent=5 // pred_fallthru
        _
      %p174 = scmp.le.s32.totalorder 1, %s17
      %p175 = scmp.lt.s32.totalorder %s17, 3
      %p176 = pnand %p174, %p175
      %p177 = pneg %p176
      // Predicated region
      $region25: #{tpu_custom_call.1} parent=5 // pred_check
        _
      $region26: #{tpu_custom_call.1} parent=5 // pred_check_branch
        %179 = sbr.rel (%p176) target = $region28
      $region27: #{tpu_custom_call.1} parent=5 // pred_region
        %s180 = ssub.s32 %s17, 1
        %s181 = sand.u32 %s44, 1
        %s182 = scalar_lea.sflag [#allocation3], %s181
        %s183 = sand.u32 %s44, 1
        %s184 = smul.addr %s183, 8
        %s185 = scalar_lea.vmem [#allocation2], %s184
        // Predicated region
        $region29: #{tpu_custom_call.1} parent=27 // pred_check
          %p186 = pneg %p57
        $region30: #{tpu_custom_call.1} parent=27 // pred_check_branch
          %188 = sbr.rel (%p186) target = $region32
        $region31: #{tpu_custom_call.1} parent=27 // pred_region
          %189 = dma.done %s182, 128
        $region32: #{tpu_custom_call.1} parent=27 // pred_fallthru
          _
        %s190 = sand.u32 %s72, 1
        %s191 = scalar_lea.sflag [#allocation6], %s190
        %s192 = sand.u32 %s72, 1
        %s193 = smul.addr %s192, 2
        %s194 = scalar_lea.vmem [#allocation5], %s193
        // Predicated region
        $region33: #{tpu_custom_call.1} parent=27 // pred_check
          %p195 = pneg %p85
        $region34: #{tpu_custom_call.1} parent=27 // pred_check_branch
          %197 = sbr.rel (%p195) target = $region36
        $region35: #{tpu_custom_call.1} parent=27 // pred_region
          %198 = dma.done %s191, 32
        $region36: #{tpu_custom_call.1} parent=27 // pred_fallthru
          _
        %s199 = sand.u32 %s44, 1
        %s200 = scalar_lea.sflag [#allocation3], %s199
        %s201 = sand.u32 %s44, 1
        %s202 = smul.addr %s201, 8
        %s203 = scalar_lea.vmem [#allocation2], %s202
        %p204 = pneg %p57
        %p205 = pneg %p54
        %s206 = sand.u32 %s72, 1
        %s207 = scalar_lea.sflag [#allocation6], %s206
        %s208 = sand.u32 %s72, 1
        %s209 = smul.addr %s208, 2
        %s210 = scalar_lea.vmem [#allocation5], %s209
        %p211 = pneg %p85
        %p212 = pneg %p82
        %p213 = pneg %p113
        %p214 = pneg %p110
        %s215 = sand.u32 %s100, 1
        %s216 = scalar_lea.sflag [#allocation4], %s215
        %s217 = sand.u32 %s100, 1
        %s218 = smul.addr %s217, 2
        %s219 = scalar_lea.vmem [#allocation7], %s218
        %s220 = smul.u32 2, %s27
        %s221 = smul.u32 2, %s27
        %s222 = smul.u32 2, %s27
        %v223 = vld [vmem:[%s185] sm:$0xff]
        %v224 = vld [vmem:[%s194] sm:$0x3]
        %v226 = vcombine.high %v223, %v223
        %vm228 = vcmask 1043456
        %v229 = vsel %vm228, %v223, -inf
        %v230 = vrot.slane %v229, 4
        %v231 = vmax.f32 %v229, %v230
        %v232 = vrot.slane %v231, 2
        %v233 = vmax.f32 %v231, %v232
        %v234 = vrot.slane %v233, 1
        %v235 = vmax.f32 %v233, %v234
        %v236 = vsel %vm228, %v226, -inf
        %v237 = vrot.slane %v236, 4
        %v238 = vmax.f32 %v236, %v237
        %v239 = vrot.slane %v238, 2
        %v240 = vmax.f32 %v238, %v239
        %v241 = vrot.slane %v240, 1
        %v242 = vmax.f32 %v240, %v241
        %v245 = vcombine.low %v235, %v242
        %v247 = vsub.f32 %v223, %v245
        %v248 = vmul.f32 %v247, 1.442695
        %v249 = vpow.pop %v248
        %v251 = vcombine.high %v249, %v249
        %v253 = vsel %vm228, %v249, 0.0
        %v254 = vrot.slane %v253, 4
        %v255 = vadd.f32 %v253, %v254
        %v256 = vrot.slane %v255, 2
        %v257 = vadd.f32 %v255, %v256
        %v258 = vrot.slane %v257, 1
        %v259 = vadd.f32 %v257, %v258
        %v260 = vsel %vm228, %v251, 0.0
        %v261 = vrot.slane %v260, 4
        %v262 = vadd.f32 %v260, %v261
        %v263 = vrot.slane %v262, 2
        %v264 = vadd.f32 %v262, %v263
        %v265 = vrot.slane %v264, 1
        %v266 = vadd.f32 %v264, %v265
        %v267 = vlog2.pop %v259
        %v268 = vmul.f32 %v267, 0.6931472
        %v269 = vlog2.pop %v266
        %v270 = vmul.f32 %v269, 0.6931472
        %v271 = vadd.f32 %v268, %v235
        %v272 = vadd.f32 %v270, %v242
        %v273 = vlaneseq
        %v274 = vshrl.u32 %v273, 7
        %v275 = vlaneseq
        %v276 = vshrl.u32 %v275, 7
        %v277 = vsub.s32 0, %v276
        %v278 = vrot.slane %v224, %v277
        %v279 = vlaneseq
        %v280 = vshrl.u32 %v279, 7
        %v281 = vsub.s32 1, %v280
        %v282 = vrot.slane %v224, %v281
        %vm283 = vcmp.eq.s32.totalorder %v274, %v278
        %vm284 = vcmp.eq.s32.totalorder %v274, %v282
        %v285 = vsel %vm283, %v223, 0.0
        %v286 = vsel %vm284, %v226, 0.0
        %v287 = vsel %vm228, %v285, 0.0
        %v288 = vrot.slane %v287, 4
        %v289 = vadd.f32 %v287, %v288
        %v290 = vrot.slane %v289, 2
        %v291 = vadd.f32 %v289, %v290
        %v292 = vrot.slane %v291, 1
        %v293 = vadd.f32 %v291, %v292
        %v294 = vsel %vm228, %v286, 0.0
        %v295 = vrot.slane %v294, 4
        %v296 = vadd.f32 %v294, %v295
        %v297 = vrot.slane %v296, 2
        %v298 = vadd.f32 %v296, %v297
        %v299 = vrot.slane %v298, 1
        %v300 = vadd.f32 %v298, %v299
        %vm301 = vcmp.ne.s32.totalorder %v224, 255
        %v302 = vsub.f32 %v271, %v293
        %v303 = vsub.f32 %v272, %v300
        %v306 = vcombine.low %v302, %v303
        %v308 = vunpack.c.l.s4 1966171168
        %v309 = vunpack.c.0.s8 %v308
        %v310 = vlaneseq
        %v311 = vshrl.u32 %v310, 7
        %v312 = vsub.s32 %v309, %v311
        %v313 = vrot.slane %v306, %v312
        %v315 = vunpack.c.l.s4 1966171168
        %v316 = vunpack.c.0.s8 %v315
        %v317 = vlaneseq
        %v318 = vshrl.u32 %v317, 7
        %v319 = vsub.s32 %v316, %v318
        %v320 = vrot.slane %v313, %v319
        %v322 = vsel %vm301, %v320, 0.0
        %v323 = vlaneseq
        %vm324 = vcmp.ge.s32.totalorder %v323, 0
        %vm325 = vcmp.lt.s32.totalorder %v323, 256
        %vm326 = vmand %vm324, %vm325
        %327 = vst.msk [vmem:[%s219] sm:$0x3] %vm326, %v322
        %s328 = sand.u32 %s100, 1
        %s329 = scalar_lea.sflag [#allocation4], %s328
        %s330 = sand.u32 %s100, 1
        %s331 = smul.addr %s330, 2
        %s332 = scalar_lea.vmem [#allocation7], %s331
        // Predicated region
        $region37: #{tpu_custom_call.1} parent=27 // pred_check
          %p333 = pneg %p110
        $region38: #{tpu_custom_call.1} parent=27 // pred_check_branch
          %335 = sbr.rel (%p333) target = $region40
        $region39: #{tpu_custom_call.1} parent=27 // pred_region
          %s336 = smul.u32 2, %s27
          %s338 = ssub.s32 32, 32
          %339 = vsyncadd %s329, %s338
          %s340 = smul.addr %s26, 2
          %s341 = sadd.s32 %s336, %s340
          %s342 = smul.addr %s341, 16
          %s343 = scalar_lea.hbm %s2, %s342
          %s345 = sshll.u32 %s332, 4
          %s346 = int_to_ptr.vmem [resolvable:$true] %s345
          %348 = dma.vmem_to_hbm [thread:$0]  %s346, 32, %s343, %s329
        $region40: #{tpu_custom_call.1} parent=27 // pred_fallthru
          _
      $region28: #{tpu_custom_call.1} parent=5 // pred_fallthru
        _
      %p349 = scmp.le.s32.totalorder 2, %s17
      // Predicated region
      $region41: #{tpu_custom_call.1} parent=5 // pred_check
        %p350 = pneg %p349
      $region42: #{tpu_custom_call.1} parent=5 // pred_check_branch
        %352 = sbr.rel (%p350) target = $region44
      $region43: #{tpu_custom_call.1} parent=5 // pred_region
        %s353 = ssub.s32 %s17, 2
        // Predicated region
        $region45: #{tpu_custom_call.1} parent=43 // pred_check
          %p354 = pneg %p116
        $region46: #{tpu_custom_call.1} parent=43 // pred_check_branch
          %356 = sbr.rel (%p354) target = $region48
        $region47: #{tpu_custom_call.1} parent=43 // pred_region
          %s357 = sand.u32 %s101, 1
          %s358 = scalar_lea.sflag [#allocation4], %s357
          %s359 = sand.u32 %s101, 1
          %s360 = smul.addr %s359, 2
          %s361 = scalar_lea.vmem [#allocation7], %s360
          %362 = dma.done %s358, 32
        $region48: #{tpu_custom_call.1} parent=43 // pred_fallthru
          _
      $region44: #{tpu_custom_call.1} parent=5 // pred_fallthru
        _
    $region6: #{tpu_custom_call.1} parent=1 // loop_footer
      %s21 = sadd.s32 1, %s17
    $region7: #{tpu_custom_call.1} parent=1 // loop_footer_branch
      %16 = sbr.rel target = $region3
    $region8: #{tpu_custom_call.1} parent=1 // loop_exit
      _
    %363 = vsyncpa [#allocation3], 1
    %s364 = scalar_lea.sflag [#allocation3], 1
    %365 = vsyncpa %s364, 1
    %366 = vsyncpa [#allocation6], 1
    %s367 = scalar_lea.sflag [#allocation6], 1
    %368 = vsyncpa %s367, 1
    %369 = vsyncpa [#allocation4], 1
    %s370 = scalar_lea.sflag [#allocation4], 1
    %371 = vsyncpa %s370, 1

</llo_original>
